<compile_context>
chip_gen: v6e
topology: v6e:2x2x1
jax: 0.10.0
libtpu: 0.0.40
codegen_flags: <defaults>
</compile_context>

<pallas_src>
import jax
import jax.numpy as jnp
from jax.experimental import pallas as pl
from jax.experimental.pallas import tpu as pltpu


# --------------------------------- kernel ----------------------------------------

def make_sepconv_kernel(C, Cout, H, W, apply_act):
    """Fused depthwise-3x3 + pointwise-1x1 (+ folded BN/bias, + optional Swish),
    planar NCHW, all on the VPU (channel counts far too small for the MXU)."""

    def kernel(x_ref, dw_ref, pw_ref, sh_ref, o_ref):
        # x_ref : (C, H+2, W+2) bf16 padded image (batch dim squeezed)   [VMEM]
        # dw_ref: (C, 9)   f32 depthwise taps, k = dy*3 + dx             [SMEM]
        # pw_ref: (C, Cout) f32 pointwise weights, BN scale pre-folded   [SMEM]
        # sh_ref: (Cout,)  f32 folded bias + BN shift                    [SMEM]
        # o_ref : (Cout, H, W) f32
        x = x_ref[...].astype(jnp.float32)                # upcast once for f32 acc

        outs = [None] * Cout
        for c in range(C):
            xc = x[c]                                     # (H+2, W+2)
            # hoist the lane-dim (dx) slices: 3 slices per channel instead of 9
            cols = [xc[:, dx:dx + W] for dx in range(3)]  # each (H+2, W)

            # depthwise 3x3: init from the first tap, then 8 fused multiply-adds
            a = cols[0][0:H, :] * dw_ref[c, 0]
            for k in range(1, 9):
                dy, dx = divmod(k, 3)
                a = a + cols[dx][dy:dy + H, :] * dw_ref[c, k]

            # pointwise 1x1 on the VPU (MXU would be a degenerate K=N=4 matmul)
            for d in range(Cout):
                t = a * pw_ref[c, d]
                outs[d] = t if outs[d] is None else outs[d] + t

        for d in range(Cout):
            y = outs[d] + sh_ref[d]                       # folded bias + BN shift
            if apply_act:                                 # MemoryEfficientSwish
                y = y * jax.nn.sigmoid(y)
            o_ref[d, :, :] = y

    return kernel


# ------------------------------ params & forward ---------------------------------

def init_params(key, cin, cout=None):
    if cout is None:
        cout = cin                               # out_channels=None -> in_channels
    k1, k2, k3 = jax.random.split(key, 3)
    return {
        # depthwise Conv2d(cin, cin, 3, stride=1, groups=cin, bias=False)
        "dw_w": 0.1 * jax.random.normal(k1, (cin, 3, 3), jnp.float32),
        # pointwise Conv2d(cin, cout, 1, stride=1, bias=True), stored (Cin, Cout)
        "pw_w": 0.1 * jax.random.normal(k2, (cin, cout), jnp.float32),
        "pw_b": 0.01 * jax.random.normal(k3, (cout,), jnp.float32),
        # BatchNorm2d(cout, momentum=0.01, eps=1e-3): fresh eval-mode running stats
        "bn_w": jnp.ones((cout,), jnp.float32),
        "bn_b": jnp.zeros((cout,), jnp.float32),
        "bn_mean": jnp.zeros((cout,), jnp.float32),
        "bn_var": jnp.ones((cout,), jnp.float32),
    }


def separable_conv_block(x_nchw, params, *, norm=True, activation=False, bn_eps=1e-3):
    B, C, H, W = x_nchw.shape
    Cout = params["pw_w"].shape[-1]
    Hp, Wp = H + 2, W + 2

    # Single wrapper-side HBM pass: SAME padding for k=3,s=1 fused with the bf16
    # cast.  No transposes, no row-strip halo gather.
    xp = jnp.pad(x_nchw.astype(jnp.bfloat16), ((0, 0), (0, 0), (1, 1), (1, 1)))

    # Fold pointwise bias + eval-mode BatchNorm into the pointwise weights (f32):
    #   BN(W.h + b) = (W*scale).h + (b*scale + shift)
    if norm:
        inv = params["bn_w"] / jnp.sqrt(params["bn_var"] + bn_eps)
        shift_bn = params["bn_b"] - params["bn_mean"] * inv
    else:
        inv = jnp.ones((Cout,), jnp.float32)
        shift_bn = jnp.zeros((Cout,), jnp.float32)
    pw_fold = params["pw_w"].astype(jnp.float32) * inv[None, :]      # (C, Cout)
    shift = params["pw_b"].astype(jnp.float32) * inv + shift_bn      # (Cout,)
    dw_flat = params["dw_w"].reshape(C, 9).astype(jnp.float32)       # (C, 9)

    kernel = make_sepconv_kernel(C, Cout, H, W, apply_act=activation)
    smem = pl.BlockSpec(memory_space=pltpu.MemorySpace.SMEM)

    return pl.pallas_call(
        kernel,
        grid=(B,),                                   # one whole padded image / step
        in_specs=[
            pl.BlockSpec((None, C, Hp, Wp), lambda b: (b, 0, 0, 0)),
            smem,                                    # depthwise taps  (scalars)
            smem,                                    # folded pointwise weights
            smem,                                    # folded bias + BN shift
        ],
        out_specs=pl.BlockSpec((None, Cout, H, W), lambda b: (b, 0, 0, 0)),
        out_shape=jax.ShapeDtypeStruct((B, Cout, H, W), jnp.float32),
        compiler_params=pltpu.CompilerParams(
            # per-step footprint is a few KB: well within every generation's VMEM
            # (re-derive tile sizes against 64 MiB physical if tiling for v7x).
            dimension_semantics=("parallel",),
            vmem_limit_bytes=32 * 1024 * 1024),
    )(xp, dw_flat, pw_fold, shift)


# --------------------------------- reference --------------------------------------

def _reference(x, params, *, norm=True, activation=False, bn_eps=1e-3):
    """Pure-JAX f32 NCHW reference of SeparableConvBlock.forward (eval mode)."""
    B, C, H, W = x.shape
    xp = jnp.pad(x, ((0, 0), (0, 0), (1, 1), (1, 1)))
    dw = params["dw_w"]
    y = jnp.zeros_like(x)
    for dy in range(3):
        for dx in range(3):
            y = y + xp[:, :, dy:dy + H, dx:dx + W] * dw[:, dy, dx][None, :, None, None]
    z = jnp.einsum("bchw,cd->bdhw", y, params["pw_w"],
                   precision=jax.lax.Precision.HIGHEST)
    z = z + params["pw_b"][None, :, None, None]
    if norm:
        inv = params["bn_w"] / jnp.sqrt(params["bn_var"] + bn_eps)
        z = (z - params["bn_mean"][None, :, None, None]) * inv[None, :, None, None] \
            + params["bn_b"][None, :, None, None]
    if activation:
        z = z * jax.nn.sigmoid(z)
    return z


# ----------------------------------- main ------------------------------------------

if __name__ == "__main__":
    # SeparableConvBlock(in_channels=4) -> out_channels=4, norm=True, activation=False
    B, Cin, H, W = 2, 4, 16, 16

    key = jax.random.PRNGKey(0)
    kp, kx = jax.random.split(key)
    params = init_params(kp, Cin)
    x = jax.random.normal(kx, (B, Cin, H, W), dtype=jnp.float32)     # NCHW, like PyTorch

    out = separable_conv_block(x, params, norm=True, activation=False)
    out = jax.block_until_ready(out)

    assert out.shape == (B, Cin, H, W), out.shape
    assert bool(jnp.all(jnp.isfinite(out)))

    ref = _reference(x, params, norm=True, activation=False)
    max_err = float(jnp.max(jnp.abs(out - ref)))
    assert max_err < 1e-2, max_err    # bf16 input activations vs f32 reference

    print("KERNEL_OK")
</pallas_src>

<mosaic_0001>
module attributes {stable_mosaic.version = 11 : i64} {
  func.func @kernel(%arg0: i32, %arg1: memref<1x4x18x18xbf16, #tpu.memory_space<vmem>>, %arg2: memref<4x9xf32, #tpu.memory_space<smem>>, %arg3: memref<4x4xf32, #tpu.memory_space<smem>>, %arg4: memref<4xf32, #tpu.memory_space<smem>>, %arg5: memref<1x4x16x16xf32, #tpu.memory_space<vmem>>) attributes {dimension_semantics = [#tpu.dimension_semantics<parallel>], iteration_bounds = array<i64: 2>, scalar_prefetch = 0 : i64, scratch_operands = 0 : i64, tpu.core_type = #tpu.core_type<tc>, window_params = [{transform_indices = @transform_0, window_bounds = array<i64: 1, 4, 18, 18>}, {transform_indices = @transform_1, window_bounds = array<i64: 4, 9>}, {transform_indices = @transform_2, window_bounds = array<i64: 4, 4>}, {transform_indices = @transform_3, window_bounds = array<i64: 4>}, {transform_indices = @transform_4, window_bounds = array<i64: 1, 4, 16, 16>}]} {
    %c0 = arith.constant 0 : index
    %c0_0 = arith.constant 0 : index
    %c0_1 = arith.constant 0 : index
    %c0_2 = arith.constant 0 : index
    %0 = vector.load %arg1[%c0, %c0_0, %c0_1, %c0_2] : memref<1x4x18x18xbf16, #tpu.memory_space<vmem>>, vector<1x4x18x18xbf16>
    %1 = vector.shape_cast %0 : vector<1x4x18x18xbf16> to vector<4x18x18xbf16>
    %2 = arith.extf %1 : vector<4x18x18xbf16> to vector<4x18x18xf32>
    %3 = vector.extract_strided_slice %2 {offsets = [0, 0, 0], sizes = [1, 18, 18], strides = [1, 1, 1]} : vector<4x18x18xf32> to vector<1x18x18xf32>
    %4 = vector.shape_cast %3 : vector<1x18x18xf32> to vector<18x18xf32>
    %5 = vector.extract_strided_slice %4 {offsets = [0, 0], sizes = [18, 16], strides = [1, 1]} : vector<18x18xf32> to vector<18x16xf32>
    %6 = vector.extract_strided_slice %4 {offsets = [0, 1], sizes = [18, 16], strides = [1, 1]} : vector<18x18xf32> to vector<18x16xf32>
    %7 = vector.extract_strided_slice %4 {offsets = [0, 2], sizes = [18, 16], strides = [1, 1]} : vector<18x18xf32> to vector<18x16xf32>
    %8 = vector.extract_strided_slice %5 {offsets = [0, 0], sizes = [16, 16], strides = [1, 1]} : vector<18x16xf32> to vector<16x16xf32>
    %c0_3 = arith.constant 0 : index
    %c0_4 = arith.constant 0 : index
    %9 = memref.load %arg2[%c0_3, %c0_4] : memref<4x9xf32, #tpu.memory_space<smem>>
    %10 = vector.broadcast %9 : f32 to vector<16x16xf32>
    %11 = arith.mulf %8, %10 : vector<16x16xf32>
    %12 = vector.extract_strided_slice %6 {offsets = [0, 0], sizes = [16, 16], strides = [1, 1]} : vector<18x16xf32> to vector<16x16xf32>
    %c0_5 = arith.constant 0 : index
    %c1 = arith.constant 1 : index
    %13 = memref.load %arg2[%c0_5, %c1] : memref<4x9xf32, #tpu.memory_space<smem>>
    %14 = vector.broadcast %13 : f32 to vector<16x16xf32>
    %15 = arith.mulf %12, %14 : vector<16x16xf32>
    %16 = arith.addf %11, %15 : vector<16x16xf32>
    %17 = vector.extract_strided_slice %7 {offsets = [0, 0], sizes = [16, 16], strides = [1, 1]} : vector<18x16xf32> to vector<16x16xf32>
    %c0_6 = arith.constant 0 : index
    %c2 = arith.constant 2 : index
    %18 = memref.load %arg2[%c0_6, %c2] : memref<4x9xf32, #tpu.memory_space<smem>>
    %19 = vector.broadcast %18 : f32 to vector<16x16xf32>
    %20 = arith.mulf %17, %19 : vector<16x16xf32>
    %21 = arith.addf %16, %20 : vector<16x16xf32>
    %22 = vector.extract_strided_slice %5 {offsets = [1, 0], sizes = [16, 16], strides = [1, 1]} : vector<18x16xf32> to vector<16x16xf32>
    %c0_7 = arith.constant 0 : index
    %c3 = arith.constant 3 : index
    %23 = memref.load %arg2[%c0_7, %c3] : memref<4x9xf32, #tpu.memory_space<smem>>
    %24 = vector.broadcast %23 : f32 to vector<16x16xf32>
    %25 = arith.mulf %22, %24 : vector<16x16xf32>
    %26 = arith.addf %21, %25 : vector<16x16xf32>
    %27 = vector.extract_strided_slice %6 {offsets = [1, 0], sizes = [16, 16], strides = [1, 1]} : vector<18x16xf32> to vector<16x16xf32>
    %c0_8 = arith.constant 0 : index
    %c4 = arith.constant 4 : index
    %28 = memref.load %arg2[%c0_8, %c4] : memref<4x9xf32, #tpu.memory_space<smem>>
    %29 = vector.broadcast %28 : f32 to vector<16x16xf32>
    %30 = arith.mulf %27, %29 : vector<16x16xf32>
    %31 = arith.addf %26, %30 : vector<16x16xf32>
    %32 = vector.extract_strided_slice %7 {offsets = [1, 0], sizes = [16, 16], strides = [1, 1]} : vector<18x16xf32> to vector<16x16xf32>
    %c0_9 = arith.constant 0 : index
    %c5 = arith.constant 5 : index
    %33 = memref.load %arg2[%c0_9, %c5] : memref<4x9xf32, #tpu.memory_space<smem>>
    %34 = vector.broadcast %33 : f32 to vector<16x16xf32>
    %35 = arith.mulf %32, %34 : vector<16x16xf32>
    %36 = arith.addf %31, %35 : vector<16x16xf32>
    %37 = vector.extract_strided_slice %5 {offsets = [2, 0], sizes = [16, 16], strides = [1, 1]} : vector<18x16xf32> to vector<16x16xf32>
    %c0_10 = arith.constant 0 : index
    %c6 = arith.constant 6 : index
    %38 = memref.load %arg2[%c0_10, %c6] : memref<4x9xf32, #tpu.memory_space<smem>>
    %39 = vector.broadcast %38 : f32 to vector<16x16xf32>
    %40 = arith.mulf %37, %39 : vector<16x16xf32>
    %41 = arith.addf %36, %40 : vector<16x16xf32>
    %42 = vector.extract_strided_slice %6 {offsets = [2, 0], sizes = [16, 16], strides = [1, 1]} : vector<18x16xf32> to vector<16x16xf32>
    %c0_11 = arith.constant 0 : index
    %c7 = arith.constant 7 : index
    %43 = memref.load %arg2[%c0_11, %c7] : memref<4x9xf32, #tpu.memory_space<smem>>
    %44 = vector.broadcast %43 : f32 to vector<16x16xf32>
    %45 = arith.mulf %42, %44 : vector<16x16xf32>
    %46 = arith.addf %41, %45 : vector<16x16xf32>
    %47 = vector.extract_strided_slice %7 {offsets = [2, 0], sizes = [16, 16], strides = [1, 1]} : vector<18x16xf32> to vector<16x16xf32>
    %c0_12 = arith.constant 0 : index
    %c8 = arith.constant 8 : index
    %48 = memref.load %arg2[%c0_12, %c8] : memref<4x9xf32, #tpu.memory_space<smem>>
    %49 = vector.broadcast %48 : f32 to vector<16x16xf32>
    %50 = arith.mulf %47, %49 : vector<16x16xf32>
    %51 = arith.addf %46, %50 : vector<16x16xf32>
    %c0_13 = arith.constant 0 : index
    %c0_14 = arith.constant 0 : index
    %52 = memref.load %arg3[%c0_13, %c0_14] : memref<4x4xf32, #tpu.memory_space<smem>>
    %53 = vector.broadcast %52 : f32 to vector<16x16xf32>
    %54 = arith.mulf %51, %53 : vector<16x16xf32>
    %c0_15 = arith.constant 0 : index
    %c1_16 = arith.constant 1 : index
    %55 = memref.load %arg3[%c0_15, %c1_16] : memref<4x4xf32, #tpu.memory_space<smem>>
    %56 = vector.broadcast %55 : f32 to vector<16x16xf32>
    %57 = arith.mulf %51, %56 : vector<16x16xf32>
    %c0_17 = arith.constant 0 : index
    %c2_18 = arith.constant 2 : index
    %58 = memref.load %arg3[%c0_17, %c2_18] : memref<4x4xf32, #tpu.memory_space<smem>>
    %59 = vector.broadcast %58 : f32 to vector<16x16xf32>
    %60 = arith.mulf %51, %59 : vector<16x16xf32>
    %c0_19 = arith.constant 0 : index
    %c3_20 = arith.constant 3 : index
    %61 = memref.load %arg3[%c0_19, %c3_20] : memref<4x4xf32, #tpu.memory_space<smem>>
    %62 = vector.broadcast %61 : f32 to vector<16x16xf32>
    %63 = arith.mulf %51, %62 : vector<16x16xf32>
    %64 = vector.extract_strided_slice %2 {offsets = [1, 0, 0], sizes = [1, 18, 18], strides = [1, 1, 1]} : vector<4x18x18xf32> to vector<1x18x18xf32>
    %65 = vector.shape_cast %64 : vector<1x18x18xf32> to vector<18x18xf32>
    %66 = vector.extract_strided_slice %65 {offsets = [0, 0], sizes = [18, 16], strides = [1, 1]} : vector<18x18xf32> to vector<18x16xf32>
    %67 = vector.extract_strided_slice %65 {offsets = [0, 1], sizes = [18, 16], strides = [1, 1]} : vector<18x18xf32> to vector<18x16xf32>
    %68 = vector.extract_strided_slice %65 {offsets = [0, 2], sizes = [18, 16], strides = [1, 1]} : vector<18x18xf32> to vector<18x16xf32>
    %69 = vector.extract_strided_slice %66 {offsets = [0, 0], sizes = [16, 16], strides = [1, 1]} : vector<18x16xf32> to vector<16x16xf32>
    %c1_21 = arith.constant 1 : index
    %c0_22 = arith.constant 0 : index
    %70 = memref.load %arg2[%c1_21, %c0_22] : memref<4x9xf32, #tpu.memory_space<smem>>
    %71 = vector.broadcast %70 : f32 to vector<16x16xf32>
    %72 = arith.mulf %69, %71 : vector<16x16xf32>
    %73 = vector.extract_strided_slice %67 {offsets = [0, 0], sizes = [16, 16], strides = [1, 1]} : vector<18x16xf32> to vector<16x16xf32>
    %c1_23 = arith.constant 1 : index
    %c1_24 = arith.constant 1 : index
    %74 = memref.load %arg2[%c1_23, %c1_24] : memref<4x9xf32, #tpu.memory_space<smem>>
    %75 = vector.broadcast %74 : f32 to vector<16x16xf32>
    %76 = arith.mulf %73, %75 : vector<16x16xf32>
    %77 = arith.addf %72, %76 : vector<16x16xf32>
    %78 = vector.extract_strided_slice %68 {offsets = [0, 0], sizes = [16, 16], strides = [1, 1]} : vector<18x16xf32> to vector<16x16xf32>
    %c1_25 = arith.constant 1 : index
    %c2_26 = arith.constant 2 : index
    %79 = memref.load %arg2[%c1_25, %c2_26] : memref<4x9xf32, #tpu.memory_space<smem>>
    %80 = vector.broadcast %79 : f32 to vector<16x16xf32>
    %81 = arith.mulf %78, %80 : vector<16x16xf32>
    %82 = arith.addf %77, %81 : vector<16x16xf32>
    %83 = vector.extract_strided_slice %66 {offsets = [1, 0], sizes = [16, 16], strides = [1, 1]} : vector<18x16xf32> to vector<16x16xf32>
    %c1_27 = arith.constant 1 : index
    %c3_28 = arith.constant 3 : index
    %84 = memref.load %arg2[%c1_27, %c3_28] : memref<4x9xf32, #tpu.memory_space<smem>>
    %85 = vector.broadcast %84 : f32 to vector<16x16xf32>
    %86 = arith.mulf %83, %85 : vector<16x16xf32>
    %87 = arith.addf %82, %86 : vector<16x16xf32>
    %88 = vector.extract_strided_slice %67 {offsets = [1, 0], sizes = [16, 16], strides = [1, 1]} : vector<18x16xf32> to vector<16x16xf32>
    %c1_29 = arith.constant 1 : index
    %c4_30 = arith.constant 4 : index
    %89 = memref.load %arg2[%c1_29, %c4_30] : memref<4x9xf32, #tpu.memory_space<smem>>
    %90 = vector.broadcast %89 : f32 to vector<16x16xf32>
    %91 = arith.mulf %88, %90 : vector<16x16xf32>
    %92 = arith.addf %87, %91 : vector<16x16xf32>
    %93 = vector.extract_strided_slice %68 {offsets = [1, 0], sizes = [16, 16], strides = [1, 1]} : vector<18x16xf32> to vector<16x16xf32>
    %c1_31 = arith.constant 1 : index
    %c5_32 = arith.constant 5 : index
    %94 = memref.load %arg2[%c1_31, %c5_32] : memref<4x9xf32, #tpu.memory_space<smem>>
    %95 = vector.broadcast %94 : f32 to vector<16x16xf32>
    %96 = arith.mulf %93, %95 : vector<16x16xf32>
    %97 = arith.addf %92, %96 : vector<16x16xf32>
    %98 = vector.extract_strided_slice %66 {offsets = [2, 0], sizes = [16, 16], strides = [1, 1]} : vector<18x16xf32> to vector<16x16xf32>
    %c1_33 = arith.constant 1 : index
    %c6_34 = arith.constant 6 : index
    %99 = memref.load %arg2[%c1_33, %c6_34] : memref<4x9xf32, #tpu.memory_space<smem>>
    %100 = vector.broadcast %99 : f32 to vector<16x16xf32>
    %101 = arith.mulf %98, %100 : vector<16x16xf32>
    %102 = arith.addf %97, %101 : vector<16x16xf32>
    %103 = vector.extract_strided_slice %67 {offsets = [2, 0], sizes = [16, 16], strides = [1, 1]} : vector<18x16xf32> to vector<16x16xf32>
    %c1_35 = arith.constant 1 : index
    %c7_36 = arith.constant 7 : index
    %104 = memref.load %arg2[%c1_35, %c7_36] : memref<4x9xf32, #tpu.memory_space<smem>>
    %105 = vector.broadcast %104 : f32 to vector<16x16xf32>
    %106 = arith.mulf %103, %105 : vector<16x16xf32>
    %107 = arith.addf %102, %106 : vector<16x16xf32>
    %108 = vector.extract_strided_slice %68 {offsets = [2, 0], sizes = [16, 16], strides = [1, 1]} : vector<18x16xf32> to vector<16x16xf32>
    %c1_37 = arith.constant 1 : index
    %c8_38 = arith.constant 8 : index
    %109 = memref.load %arg2[%c1_37, %c8_38] : memref<4x9xf32, #tpu.memory_space<smem>>
    %110 = vector.broadcast %109 : f32 to vector<16x16xf32>
    %111 = arith.mulf %108, %110 : vector<16x16xf32>
    %112 = arith.addf %107, %111 : vector<16x16xf32>
    %c1_39 = arith.constant 1 : index
    %c0_40 = arith.constant 0 : index
    %113 = memref.load %arg3[%c1_39, %c0_40] : memref<4x4xf32, #tpu.memory_space<smem>>
    %114 = vector.broadcast %113 : f32 to vector<16x16xf32>
    %115 = arith.mulf %112, %114 : vector<16x16xf32>
    %116 = arith.addf %54, %115 : vector<16x16xf32>
    %c1_41 = arith.constant 1 : index
    %c1_42 = arith.constant 1 : index
    %117 = memref.load %arg3[%c1_41, %c1_42] : memref<4x4xf32, #tpu.memory_space<smem>>
    %118 = vector.broadcast %117 : f32 to vector<16x16xf32>
    %119 = arith.mulf %112, %118 : vector<16x16xf32>
    %120 = arith.addf %57, %119 : vector<16x16xf32>
    %c1_43 = arith.constant 1 : index
    %c2_44 = arith.constant 2 : index
    %121 = memref.load %arg3[%c1_43, %c2_44] : memref<4x4xf32, #tpu.memory_space<smem>>
    %122 = vector.broadcast %121 : f32 to vector<16x16xf32>
    %123 = arith.mulf %112, %122 : vector<16x16xf32>
    %124 = arith.addf %60, %123 : vector<16x16xf32>
    %c1_45 = arith.constant 1 : index
    %c3_46 = arith.constant 3 : index
    %125 = memref.load %arg3[%c1_45, %c3_46] : memref<4x4xf32, #tpu.memory_space<smem>>
    %126 = vector.broadcast %125 : f32 to vector<16x16xf32>
    %127 = arith.mulf %112, %126 : vector<16x16xf32>
    %128 = arith.addf %63, %127 : vector<16x16xf32>
    %129 = vector.extract_strided_slice %2 {offsets = [2, 0, 0], sizes = [1, 18, 18], strides = [1, 1, 1]} : vector<4x18x18xf32> to vector<1x18x18xf32>
    %130 = vector.shape_cast %129 : vector<1x18x18xf32> to vector<18x18xf32>
    %131 = vector.extract_strided_slice %130 {offsets = [0, 0], sizes = [18, 16], strides = [1, 1]} : vector<18x18xf32> to vector<18x16xf32>
    %132 = vector.extract_strided_slice %130 {offsets = [0, 1], sizes = [18, 16], strides = [1, 1]} : vector<18x18xf32> to vector<18x16xf32>
    %133 = vector.extract_strided_slice %130 {offsets = [0, 2], sizes = [18, 16], strides = [1, 1]} : vector<18x18xf32> to vector<18x16xf32>
    %134 = vector.extract_strided_slice %131 {offsets = [0, 0], sizes = [16, 16], strides = [1, 1]} : vector<18x16xf32> to vector<16x16xf32>
    %c2_47 = arith.constant 2 : index
    %c0_48 = arith.constant 0 : index
    %135 = memref.load %arg2[%c2_47, %c0_48] : memref<4x9xf32, #tpu.memory_space<smem>>
    %136 = vector.broadcast %135 : f32 to vector<16x16xf32>
    %137 = arith.mulf %134, %136 : vector<16x16xf32>
    %138 = vector.extract_strided_slice %132 {offsets = [0, 0], sizes = [16, 16], strides = [1, 1]} : vector<18x16xf32> to vector<16x16xf32>
    %c2_49 = arith.constant 2 : index
    %c1_50 = arith.constant 1 : index
    %139 = memref.load %arg2[%c2_49, %c1_50] : memref<4x9xf32, #tpu.memory_space<smem>>
    %140 = vector.broadcast %139 : f32 to vector<16x16xf32>
    %141 = arith.mulf %138, %140 : vector<16x16xf32>
    %142 = arith.addf %137, %141 : vector<16x16xf32>
    %143 = vector.extract_strided_slice %133 {offsets = [0, 0], sizes = [16, 16], strides = [1, 1]} : vector<18x16xf32> to vector<16x16xf32>
    %c2_51 = arith.constant 2 : index
    %c2_52 = arith.constant 2 : index
    %144 = memref.load %arg2[%c2_51, %c2_52] : memref<4x9xf32, #tpu.memory_space<smem>>
    %145 = vector.broadcast %144 : f32 to vector<16x16xf32>
    %146 = arith.mulf %143, %145 : vector<16x16xf32>
    %147 = arith.addf %142, %146 : vector<16x16xf32>
    %148 = vector.extract_strided_slice %131 {offsets = [1, 0], sizes = [16, 16], strides = [1, 1]} : vector<18x16xf32> to vector<16x16xf32>
    %c2_53 = arith.constant 2 : index
    %c3_54 = arith.constant 3 : index
    %149 = memref.load %arg2[%c2_53, %c3_54] : memref<4x9xf32, #tpu.memory_space<smem>>
    %150 = vector.broadcast %149 : f32 to vector<16x16xf32>
    %151 = arith.mulf %148, %150 : vector<16x16xf32>
    %152 = arith.addf %147, %151 : vector<16x16xf32>
    %153 = vector.extract_strided_slice %132 {offsets = [1, 0], sizes = [16, 16], strides = [1, 1]} : vector<18x16xf32> to vector<16x16xf32>
    %c2_55 = arith.constant 2 : index
    %c4_56 = arith.constant 4 : index
    %154 = memref.load %arg2[%c2_55, %c4_56] : memref<4x9xf32, #tpu.memory_space<smem>>
    %155 = vector.broadcast %154 : f32 to vector<16x16xf32>
    %156 = arith.mulf %153, %155 : vector<16x16xf32>
    %157 = arith.addf %152, %156 : vector<16x16xf32>
    %158 = vector.extract_strided_slice %133 {offsets = [1, 0], sizes = [16, 16], strides = [1, 1]} : vector<18x16xf32> to vector<16x16xf32>
    %c2_57 = arith.constant 2 : index
    %c5_58 = arith.constant 5 : index
    %159 = memref.load %arg2[%c2_57, %c5_58] : memref<4x9xf32, #tpu.memory_space<smem>>
    %160 = vector.broadcast %159 : f32 to vector<16x16xf32>
    %161 = arith.mulf %158, %160 : vector<16x16xf32>
    %162 = arith.addf %157, %161 : vector<16x16xf32>
    %163 = vector.extract_strided_slice %131 {offsets = [2, 0], sizes = [16, 16], strides = [1, 1]} : vector<18x16xf32> to vector<16x16xf32>
    %c2_59 = arith.constant 2 : index
    %c6_60 = arith.constant 6 : index
    %164 = memref.load %arg2[%c2_59, %c6_60] : memref<4x9xf32, #tpu.memory_space<smem>>
    %165 = vector.broadcast %164 : f32 to vector<16x16xf32>
    %166 = arith.mulf %163, %165 : vector<16x16xf32>
    %167 = arith.addf %162, %166 : vector<16x16xf32>
    %168 = vector.extract_strided_slice %132 {offsets = [2, 0], sizes = [16, 16], strides = [1, 1]} : vector<18x16xf32> to vector<16x16xf32>
    %c2_61 = arith.constant 2 : index
    %c7_62 = arith.constant 7 : index
    %169 = memref.load %arg2[%c2_61, %c7_62] : memref<4x9xf32, #tpu.memory_space<smem>>
    %170 = vector.broadcast %169 : f32 to vector<16x16xf32>
    %171 = arith.mulf %168, %170 : vector<16x16xf32>
    %172 = arith.addf %167, %171 : vector<16x16xf32>
    %173 = vector.extract_strided_slice %133 {offsets = [2, 0], sizes = [16, 16], strides = [1, 1]} : vector<18x16xf32> to vector<16x16xf32>
    %c2_63 = arith.constant 2 : index
    %c8_64 = arith.constant 8 : index
    %174 = memref.load %arg2[%c2_63, %c8_64] : memref<4x9xf32, #tpu.memory_space<smem>>
    %175 = vector.broadcast %174 : f32 to vector<16x16xf32>
    %176 = arith.mulf %173, %175 : vector<16x16xf32>
    %177 = arith.addf %172, %176 : vector<16x16xf32>
    %c2_65 = arith.constant 2 : index
    %c0_66 = arith.constant 0 : index
    %178 = memref.load %arg3[%c2_65, %c0_66] : memref<4x4xf32, #tpu.memory_space<smem>>
    %179 = vector.broadcast %178 : f32 to vector<16x16xf32>
    %180 = arith.mulf %177, %179 : vector<16x16xf32>
    %181 = arith.addf %116, %180 : vector<16x16xf32>
    %c2_67 = arith.constant 2 : index
    %c1_68 = arith.constant 1 : index
    %182 = memref.load %arg3[%c2_67, %c1_68] : memref<4x4xf32, #tpu.memory_space<smem>>
    %183 = vector.broadcast %182 : f32 to vector<16x16xf32>
    %184 = arith.mulf %177, %183 : vector<16x16xf32>
    %185 = arith.addf %120, %184 : vector<16x16xf32>
    %c2_69 = arith.constant 2 : index
    %c2_70 = arith.constant 2 : index
    %186 = memref.load %arg3[%c2_69, %c2_70] : memref<4x4xf32, #tpu.memory_space<smem>>
    %187 = vector.broadcast %186 : f32 to vector<16x16xf32>
    %188 = arith.mulf %177, %187 : vector<16x16xf32>
    %189 = arith.addf %124, %188 : vector<16x16xf32>
    %c2_71 = arith.constant 2 : index
    %c3_72 = arith.constant 3 : index
    %190 = memref.load %arg3[%c2_71, %c3_72] : memref<4x4xf32, #tpu.memory_space<smem>>
    %191 = vector.broadcast %190 : f32 to vector<16x16xf32>
    %192 = arith.mulf %177, %191 : vector<16x16xf32>
    %193 = arith.addf %128, %192 : vector<16x16xf32>
    %194 = vector.extract_strided_slice %2 {offsets = [3, 0, 0], sizes = [1, 18, 18], strides = [1, 1, 1]} : vector<4x18x18xf32> to vector<1x18x18xf32>
    %195 = vector.shape_cast %194 : vector<1x18x18xf32> to vector<18x18xf32>
    %196 = vector.extract_strided_slice %195 {offsets = [0, 0], sizes = [18, 16], strides = [1, 1]} : vector<18x18xf32> to vector<18x16xf32>
    %197 = vector.extract_strided_slice %195 {offsets = [0, 1], sizes = [18, 16], strides = [1, 1]} : vector<18x18xf32> to vector<18x16xf32>
    %198 = vector.extract_strided_slice %195 {offsets = [0, 2], sizes = [18, 16], strides = [1, 1]} : vector<18x18xf32> to vector<18x16xf32>
    %199 = vector.extract_strided_slice %196 {offsets = [0, 0], sizes = [16, 16], strides = [1, 1]} : vector<18x16xf32> to vector<16x16xf32>
    %c3_73 = arith.constant 3 : index
    %c0_74 = arith.constant 0 : index
    %200 = memref.load %arg2[%c3_73, %c0_74] : memref<4x9xf32, #tpu.memory_space<smem>>
    %201 = vector.broadcast %200 : f32 to vector<16x16xf32>
    %202 = arith.mulf %199, %201 : vector<16x16xf32>
    %203 = vector.extract_strided_slice %197 {offsets = [0, 0], sizes = [16, 16], strides = [1, 1]} : vector<18x16xf32> to vector<16x16xf32>
    %c3_75 = arith.constant 3 : index
    %c1_76 = arith.constant 1 : index
    %204 = memref.load %arg2[%c3_75, %c1_76] : memref<4x9xf32, #tpu.memory_space<smem>>
    %205 = vector.broadcast %204 : f32 to vector<16x16xf32>
    %206 = arith.mulf %203, %205 : vector<16x16xf32>
    %207 = arith.addf %202, %206 : vector<16x16xf32>
    %208 = vector.extract_strided_slice %198 {offsets = [0, 0], sizes = [16, 16], strides = [1, 1]} : vector<18x16xf32> to vector<16x16xf32>
    %c3_77 = arith.constant 3 : index
    %c2_78 = arith.constant 2 : index
    %209 = memref.load %arg2[%c3_77, %c2_78] : memref<4x9xf32, #tpu.memory_space<smem>>
    %210 = vector.broadcast %209 : f32 to vector<16x16xf32>
    %211 = arith.mulf %208, %210 : vector<16x16xf32>
    %212 = arith.addf %207, %211 : vector<16x16xf32>
    %213 = vector.extract_strided_slice %196 {offsets = [1, 0], sizes = [16, 16], strides = [1, 1]} : vector<18x16xf32> to vector<16x16xf32>
    %c3_79 = arith.constant 3 : index
    %c3_80 = arith.constant 3 : index
    %214 = memref.load %arg2[%c3_79, %c3_80] : memref<4x9xf32, #tpu.memory_space<smem>>
    %215 = vector.broadcast %214 : f32 to vector<16x16xf32>
    %216 = arith.mulf %213, %215 : vector<16x16xf32>
    %217 = arith.addf %212, %216 : vector<16x16xf32>
    %218 = vector.extract_strided_slice %197 {offsets = [1, 0], sizes = [16, 16], strides = [1, 1]} : vector<18x16xf32> to vector<16x16xf32>
    %c3_81 = arith.constant 3 : index
    %c4_82 = arith.constant 4 : index
    %219 = memref.load %arg2[%c3_81, %c4_82] : memref<4x9xf32, #tpu.memory_space<smem>>
    %220 = vector.broadcast %219 : f32 to vector<16x16xf32>
    %221 = arith.mulf %218, %220 : vector<16x16xf32>
    %222 = arith.addf %217, %221 : vector<16x16xf32>
    %223 = vector.extract_strided_slice %198 {offsets = [1, 0], sizes = [16, 16], strides = [1, 1]} : vector<18x16xf32> to vector<16x16xf32>
    %c3_83 = arith.constant 3 : index
    %c5_84 = arith.constant 5 : index
    %224 = memref.load %arg2[%c3_83, %c5_84] : memref<4x9xf32, #tpu.memory_space<smem>>
    %225 = vector.broadcast %224 : f32 to vector<16x16xf32>
    %226 = arith.mulf %223, %225 : vector<16x16xf32>
    %227 = arith.addf %222, %226 : vector<16x16xf32>
    %228 = vector.extract_strided_slice %196 {offsets = [2, 0], sizes = [16, 16], strides = [1, 1]} : vector<18x16xf32> to vector<16x16xf32>
    %c3_85 = arith.constant 3 : index
    %c6_86 = arith.constant 6 : index
    %229 = memref.load %arg2[%c3_85, %c6_86] : memref<4x9xf32, #tpu.memory_space<smem>>
    %230 = vector.broadcast %229 : f32 to vector<16x16xf32>
    %231 = arith.mulf %228, %230 : vector<16x16xf32>
    %232 = arith.addf %227, %231 : vector<16x16xf32>
    %233 = vector.extract_strided_slice %197 {offsets = [2, 0], sizes = [16, 16], strides = [1, 1]} : vector<18x16xf32> to vector<16x16xf32>
    %c3_87 = arith.constant 3 : index
    %c7_88 = arith.constant 7 : index
    %234 = memref.load %arg2[%c3_87, %c7_88] : memref<4x9xf32, #tpu.memory_space<smem>>
    %235 = vector.broadcast %234 : f32 to vector<16x16xf32>
    %236 = arith.mulf %233, %235 : vector<16x16xf32>
    %237 = arith.addf %232, %236 : vector<16x16xf32>
    %238 = vector.extract_strided_slice %198 {offsets = [2, 0], sizes = [16, 16], strides = [1, 1]} : vector<18x16xf32> to vector<16x16xf32>
    %c3_89 = arith.constant 3 : index
    %c8_90 = arith.constant 8 : index
    %239 = memref.load %arg2[%c3_89, %c8_90] : memref<4x9xf32, #tpu.memory_space<smem>>
    %240 = vector.broadcast %239 : f32 to vector<16x16xf32>
    %241 = arith.mulf %238, %240 : vector<16x16xf32>
    %242 = arith.addf %237, %241 : vector<16x16xf32>
    %c3_91 = arith.constant 3 : index
    %c0_92 = arith.constant 0 : index
    %243 = memref.load %arg3[%c3_91, %c0_92] : memref<4x4xf32, #tpu.memory_space<smem>>
    %244 = vector.broadcast %243 : f32 to vector<16x16xf32>
    %245 = arith.mulf %242, %244 : vector<16x16xf32>
    %246 = arith.addf %181, %245 : vector<16x16xf32>
    %c3_93 = arith.constant 3 : index
    %c1_94 = arith.constant 1 : index
    %247 = memref.load %arg3[%c3_93, %c1_94] : memref<4x4xf32, #tpu.memory_space<smem>>
    %248 = vector.broadcast %247 : f32 to vector<16x16xf32>
    %249 = arith.mulf %242, %248 : vector<16x16xf32>
    %250 = arith.addf %185, %249 : vector<16x16xf32>
    %c3_95 = arith.constant 3 : index
    %c2_96 = arith.constant 2 : index
    %251 = memref.load %arg3[%c3_95, %c2_96] : memref<4x4xf32, #tpu.memory_space<smem>>
    %252 = vector.broadcast %251 : f32 to vector<16x16xf32>
    %253 = arith.mulf %242, %252 : vector<16x16xf32>
    %254 = arith.addf %189, %253 : vector<16x16xf32>
    %c3_97 = arith.constant 3 : index
    %c3_98 = arith.constant 3 : index
    %255 = memref.load %arg3[%c3_97, %c3_98] : memref<4x4xf32, #tpu.memory_space<smem>>
    %256 = vector.broadcast %255 : f32 to vector<16x16xf32>
    %257 = arith.mulf %242, %256 : vector<16x16xf32>
    %258 = arith.addf %193, %257 : vector<16x16xf32>
    %c0_99 = arith.constant 0 : index
    %259 = memref.load %arg4[%c0_99] : memref<4xf32, #tpu.memory_space<smem>>
    %260 = vector.broadcast %259 : f32 to vector<16x16xf32>
    %261 = arith.addf %246, %260 : vector<16x16xf32>
    %c0_100 = arith.constant 0 : index
    %c0_101 = arith.constant 0 : index
    %c0_102 = arith.constant 0 : index
    %c0_103 = arith.constant 0 : index
    %262 = vector.load %arg5[%c0_100, %c0_101, %c0_102, %c0_103] : memref<1x4x16x16xf32, #tpu.memory_space<vmem>>, vector<1x1x16x16xf32>
    %263 = vector.shape_cast %262 : vector<1x1x16x16xf32> to vector<16x16xf32>
    %264 = vector.shape_cast %261 : vector<16x16xf32> to vector<1x1x16x16xf32>
    tpu.vector_store %arg5[%c0_100, %c0_101, %c0_102, %c0_103], %264 {strides = array<i32>} : memref<1x4x16x16xf32, #tpu.memory_space<vmem>>, vector<1x1x16x16xf32>,
    %c1_104 = arith.constant 1 : index
    %265 = memref.load %arg4[%c1_104] : memref<4xf32, #tpu.memory_space<smem>>
    %266 = vector.broadcast %265 : f32 to vector<16x16xf32>
    %267 = arith.addf %250, %266 : vector<16x16xf32>
    %c0_105 = arith.constant 0 : index
    %c1_106 = arith.constant 1 : index
    %c0_107 = arith.constant 0 : index
    %c0_108 = arith.constant 0 : index
    %268 = vector.load %arg5[%c0_105, %c1_106, %c0_107, %c0_108] : memref<1x4x16x16xf32, #tpu.memory_space<vmem>>, vector<1x1x16x16xf32>
    %269 = vector.shape_cast %268 : vector<1x1x16x16xf32> to vector<16x16xf32>
    %270 = vector.shape_cast %267 : vector<16x16xf32> to vector<1x1x16x16xf32>
    tpu.vector_store %arg5[%c0_105, %c1_106, %c0_107, %c0_108], %270 {strides = array<i32>} : memref<1x4x16x16xf32, #tpu.memory_space<vmem>>, vector<1x1x16x16xf32>,
    %c2_109 = arith.constant 2 : index
    %271 = memref.load %arg4[%c2_109] : memref<4xf32, #tpu.memory_space<smem>>
    %272 = vector.broadcast %271 : f32 to vector<16x16xf32>
    %273 = arith.addf %254, %272 : vector<16x16xf32>
    %c0_110 = arith.constant 0 : index
    %c2_111 = arith.constant 2 : index
    %c0_112 = arith.constant 0 : index
    %c0_113 = arith.constant 0 : index
    %274 = vector.load %arg5[%c0_110, %c2_111, %c0_112, %c0_113] : memref<1x4x16x16xf32, #tpu.memory_space<vmem>>, vector<1x1x16x16xf32>
    %275 = vector.shape_cast %274 : vector<1x1x16x16xf32> to vector<16x16xf32>
    %276 = vector.shape_cast %273 : vector<16x16xf32> to vector<1x1x16x16xf32>
    tpu.vector_store %arg5[%c0_110, %c2_111, %c0_112, %c0_113], %276 {strides = array<i32>} : memref<1x4x16x16xf32, #tpu.memory_space<vmem>>, vector<1x1x16x16xf32>,
    %c3_114 = arith.constant 3 : index
    %277 = memref.load %arg4[%c3_114] : memref<4xf32, #tpu.memory_space<smem>>
    %278 = vector.broadcast %277 : f32 to vector<16x16xf32>
    %279 = arith.addf %258, %278 : vector<16x16xf32>
    %c0_115 = arith.constant 0 : index
    %c3_116 = arith.constant 3 : index
    %c0_117 = arith.constant 0 : index
    %c0_118 = arith.constant 0 : index
    %280 = vector.load %arg5[%c0_115, %c3_116, %c0_117, %c0_118] : memref<1x4x16x16xf32, #tpu.memory_space<vmem>>, vector<1x1x16x16xf32>
    %281 = vector.shape_cast %280 : vector<1x1x16x16xf32> to vector<16x16xf32>
    %282 = vector.shape_cast %279 : vector<16x16xf32> to vector<1x1x16x16xf32>
    tpu.vector_store %arg5[%c0_115, %c3_116, %c0_117, %c0_118], %282 {strides = array<i32>} : memref<1x4x16x16xf32, #tpu.memory_space<vmem>>, vector<1x1x16x16xf32>,
    return
  }
  func.func @transform_0(%arg0: i32) -> (i32, i32, i32, i32) {
    %c0_i32 = arith.constant 0 : i32
    %c0_i32_0 = arith.constant 0 : i32
    %c0_i32_1 = arith.constant 0 : i32
    %c0_i32_2 = arith.constant 0 : i32
    return %arg0, %c0_i32, %c0_i32_0, %c0_i32_1 : i32, i32, i32, i32
  }
  func.func @transform_1(%arg0: i32) -> (i32, i32) {
    %c0_i32 = arith.constant 0 : i32
    %c0_i32_0 = arith.constant 0 : i32
    %c0_i32_1 = arith.constant 0 : i32
    return %c0_i32, %c0_i32_0 : i32, i32
  }
  func.func @transform_2(%arg0: i32) -> (i32, i32) {
    %c0_i32 = arith.constant 0 : i32
    %c0_i32_0 = arith.constant 0 : i32
    %c0_i32_1 = arith.constant 0 : i32
    return %c0_i32, %c0_i32_0 : i32, i32
  }
  func.func @transform_3(%arg0: i32) -> i32 {
    %c0_i32 = arith.constant 0 : i32
    %c0_i32_0 = arith.constant 0 : i32
    return %c0_i32 : i32
  }
  func.func @transform_4(%arg0: i32) -> (i32, i32, i32, i32) {
    %c0_i32 = arith.constant 0 : i32
    %c0_i32_0 = arith.constant 0 : i32
    %c0_i32_1 = arith.constant 0 : i32
    %c0_i32_2 = arith.constant 0 : i32
    return %arg0, %c0_i32, %c0_i32_0, %c0_i32_1 : i32, i32, i32, i32
  }
}

</mosaic_0001>

<llo_original>
// kernel: tpu_custom_call.1
$region0: #{tpu_custom_call.1}
  #allocation0 [shape = 'u32[]', space=smem, size = 0x4, offset = 0x4, fixed_abs, tag = 'smem constant byte address 0x4 - core index']
  #allocation1 [shape = 'u32[144,128]{1,0:T(1,128)}', space=vmem, size = 0x12000, scoped, tag = 'internal scratch']
  %s0 = inlined_call_operand.vmem [shape: bf16[2,4,18,18], index: 0, kind: input, shape index: {}]
  %s1 = inlined_call_operand.vmem [shape: f32[4,9], index: 1, kind: input, shape index: {}]
  %s2 = inlined_call_operand.vmem [shape: f32[4,4], index: 2, kind: input, shape index: {}]
  %s3 = inlined_call_operand.vmem [shape: f32[4], index: 3, kind: input, shape index: {}]
  %s4 = inlined_call_operand.hbm [shape: f32[2,4,16,16], index: 4, kind: output, shape index: {}]
  %s5 = sld [smem:[#allocation0]]
  $region61: #{tpu_custom_call.1} parent=0
    _
  %s7 = ssub.s32 1, %s5
  %s8 = scalar_select 0, %s7, %s5
  $region1: #{tpu_custom_call.1} parent=0
    #allocation2 [shape = 'u8[2048]{0}', space=smem, size = 0x800, scoped, tag = 'input window, operand 1, single buffered']
    #allocation3 [shape = 's32[2]{0}', space=sflag, size = 0x8, scoped, tag = 'scoped memory for tpu_custom_call.1']
    #allocation4 [shape = 's32[2]{0}', space=sflag, size = 0x8, scoped, tag = 'scoped memory for tpu_custom_call.1']
    #allocation5 [shape = 'u8[2048]{0}', space=smem, size = 0x800, scoped, tag = 'input window, operand 2, single buffered']
    #allocation6 [shape = 's32[1]{0}', space=sflag, size = 0x4, scoped, tag = 'scoped memory for tpu_custom_call.1']
    #allocation7 [shape = 'u8[512]{0}', space=smem, size = 0x200, scoped, tag = 'input window, operand 3, single buffered']
    #allocation8 [shape = 'u8[65536]{0}', space=vmem, size = 0x10000, scoped, tag = 'output window, operand 0']
    %9 = vsyncpa [#allocation4], 0
    %10 = vsyncpa [#allocation6], 0
    %11 = vsyncpa [#allocation3], 0
    %s12 = scalar_lea.sflag [#allocation3], 1
    %13 = vsyncpa %s12, 0
    loop: start=0, step=1, limit=4
    $region2: #{tpu_custom_call.1} parent=1 // loop_pre_header
      _
    $region3: #{tpu_custom_call.1} parent=1 // loop_header
      %s15 = sphi 0, %s19
      %p16 = scmp.ge.s32.totalorder %s15, 4
      %s25 = sphi 0, %s27
      %s28 = sphi 0, %s25
      %s29 = sphi 0, %s28
      %s45 = sphi 0, %s29
      %s49 = sphi 0, %s49
      %s51 = sphi 0, %s49
      %s52 = sphi 0, %s51
      %s66 = sphi 0, %s52
      %s70 = sphi 0, %s70
      %s72 = sphi 0, %s70
      %s73 = sphi 0, %s72
      %s87 = sphi 0, %s73
      %s91 = sphi 0, %s91
      %s93 = sphi 0, %s91
      %s94 = sphi 0, %s93
      %s108 = sphi 0, %s94
      %s114 = sphi 0, %s116
      %s117 = sphi 0, %s114
      %s118 = sphi 0, %s117
      %s134 = sphi 0, %s118
    $region4: #{tpu_custom_call.1} parent=1 // loop_header_branch
      %18 = sbr.rel (%p16) target = $region8
    $region5: #{tpu_custom_call.1} parent=1 // loop_body
      %s20 = ssub.s32 %s15, 1
      %s21 = ssub.s32 %s15, 2
      %s22 = sadd.s32 %s15, 1
      %s23 = ssub.s32 %s15, %s22
      %p24 = scmp.eq.s32.totalorder %s23, 0
      %s26 = sadd.s32 %s25, 1
      %s27 = scalar_select %p24, %s25, %s26
      %p30 = pneg %p24
      %p31 = scmp.eq.s32.totalorder %s15, 1
      %p32 = por %p30, %p31
      %p33 = scmp.ne.s32.totalorder %s25, %s28
      %p34 = scmp.eq.s32.totalorder %s15, 0
      %p35 = por %p33, %p34
      %p36 = scmp.ne.s32.totalorder %s25, %s28
      %p37 = scmp.eq.s32.totalorder %s20, 1
      %p38 = por %p36, %p37
      %p39 = scmp.ne.s32.totalorder %s28, %s29
      %p40 = scmp.eq.s32.totalorder %s20, 0
      %p41 = por %p39, %p40
      %p42 = scmp.ne.s32.totalorder %s28, %s29
      %p43 = scmp.eq.s32.totalorder %s21, 1
      %p44 = por %p42, %p43
      %p46 = scmp.ne.s32.totalorder %s29, %s45
      %p47 = scmp.eq.s32.totalorder %s21, 0
      %p48 = por %p46, %p47
      %s50 = sadd.s32 %s49, 1
      %p53 = scmp.eq.s32.totalorder %s15, 1
      %p54 = scmp.ne.s32.totalorder %s49, %s51
      %p55 = scmp.eq.s32.totalorder %s15, 0
      %p56 = por %p54, %p55
      %p57 = scmp.ne.s32.totalorder %s49, %s51
      %p58 = scmp.eq.s32.totalorder %s20, 1
      %p59 = por %p57, %p58
      %p60 = scmp.ne.s32.totalorder %s51, %s52
      %p61 = scmp.eq.s32.totalorder %s20, 0
      %p62 = por %p60, %p61
      %p63 = scmp.ne.s32.totalorder %s51, %s52
      %p64 = scmp.eq.s32.totalorder %s21, 1
      %p65 = por %p63, %p64
      %p67 = scmp.ne.s32.totalorder %s52, %s66
      %p68 = scmp.eq.s32.totalorder %s21, 0
      %p69 = por %p67, %p68
      %s71 = sadd.s32 %s70, 1
      %p74 = scmp.eq.s32.totalorder %s15, 1
      %p75 = scmp.ne.s32.totalorder %s70, %s72
      %p76 = scmp.eq.s32.totalorder %s15, 0
      %p77 = por %p75, %p76
      %p78 = scmp.ne.s32.totalorder %s70, %s72
      %p79 = scmp.eq.s32.totalorder %s20, 1
      %p80 = por %p78, %p79
      %p81 = scmp.ne.s32.totalorder %s72, %s73
      %p82 = scmp.eq.s32.totalorder %s20, 0
      %p83 = por %p81, %p82
      %p84 = scmp.ne.s32.totalorder %s72, %s73
      %p85 = scmp.eq.s32.totalorder %s21, 1
      %p86 = por %p84, %p85
      %p88 = scmp.ne.s32.totalorder %s73, %s87
      %p89 = scmp.eq.s32.totalorder %s21, 0
      %p90 = por %p88, %p89
      %s92 = sadd.s32 %s91, 1
      %p95 = scmp.eq.s32.totalorder %s15, 1
      %p96 = scmp.ne.s32.totalorder %s91, %s93
      %p97 = scmp.eq.s32.totalorder %s15, 0
      %p98 = por %p96, %p97
      %p99 = scmp.ne.s32.totalorder %s91, %s93
      %p100 = scmp.eq.s32.totalorder %s20, 1
      %p101 = por %p99, %p100
      %p102 = scmp.ne.s32.totalorder %s93, %s94
      %p103 = scmp.eq.s32.totalorder %s20, 0
      %p104 = por %p102, %p103
      %p105 = scmp.ne.s32.totalorder %s93, %s94
      %p106 = scmp.eq.s32.totalorder %s21, 1
      %p107 = por %p105, %p106
      %p109 = scmp.ne.s32.totalorder %s94, %s108
      %p110 = scmp.eq.s32.totalorder %s21, 0
      %p111 = por %p109, %p110
      %s112 = ssub.s32 %s15, %s22
      %p113 = scmp.eq.s32.totalorder %s112, 0
      %s115 = sadd.s32 %s114, 1
      %s116 = scalar_select %p113, %s114, %s115
      %p119 = pneg %p113
      %p120 = scmp.eq.s32.totalorder %s15, 1
      %p121 = por %p119, %p120
      %p122 = scmp.ne.s32.totalorder %s114, %s117
      %p123 = scmp.eq.s32.totalorder %s15, 0
      %p124 = por %p122, %p123
      %p125 = scmp.ne.s32.totalorder %s114, %s117
      %p126 = scmp.eq.s32.totalorder %s20, 1
      %p127 = por %p125, %p126
      %p128 = scmp.ne.s32.totalorder %s117, %s118
      %p129 = scmp.eq.s32.totalorder %s20, 0
      %p130 = por %p128, %p129
      %p131 = scmp.ne.s32.totalorder %s117, %s118
      %p132 = scmp.eq.s32.totalorder %s21, 1
      %p133 = por %p131, %p132
      %p135 = scmp.ne.s32.totalorder %s118, %s134
      %p136 = scmp.eq.s32.totalorder %s21, 0
      %p137 = por %p135, %p136
      %p138 = scmp.le.s32.totalorder 1, %s15
      %p139 = scmp.lt.s32.totalorder %s15, 3
      %p140 = pnand %p138, %p139
      %p141 = pneg %p140
      // Predicated region
      $region9: #{tpu_custom_call.1} parent=5 // pred_check
        _
      $region10: #{tpu_custom_call.1} parent=5 // pred_check_branch
        %143 = sbr.rel (%p140) target = $region12
      $region11: #{tpu_custom_call.1} parent=5 // pred_region
        %s144 = ssub.s32 %s15, 1
        // Predicated region
        $region13: #{tpu_custom_call.1} parent=11 // pred_check
          %p145 = pneg %p62
        $region14: #{tpu_custom_call.1} parent=11 // pred_check_branch
          %147 = sbr.rel (%p145) target = $region16
        $region15: #{tpu_custom_call.1} parent=11 // pred_region
          %s149 = ssub.s32 64, 64
          %150 = vsyncadd [#allocation4], %s149
          %s152 = sshll.u32 %s1, 4
          %s153 = int_to_ptr.vmem [resolvable:$true] %s152
          %155 = dma.vmem_to_smem %s153, 64, [#allocation2], [#allocation4]
        $region16: #{tpu_custom_call.1} parent=11 // pred_fallthru
          _
        // Predicated region
        $region17: #{tpu_custom_call.1} parent=11 // pred_check
          %p156 = pneg %p83
        $region18: #{tpu_custom_call.1} parent=11 // pred_check_branch
          %158 = sbr.rel (%p156) target = $region20
        $region19: #{tpu_custom_call.1} parent=11 // pred_region
          %s160 = ssub.s32 64, 64
          %161 = vsyncadd [#allocation6], %s160
          %s163 = sshll.u32 %s2, 4
          %s164 = int_to_ptr.vmem [resolvable:$true] %s163
          %166 = dma.vmem_to_smem %s164, 64, [#allocation5], [#allocation6]
        $region20: #{tpu_custom_call.1} parent=11 // pred_fallthru
          _
        // Predicated region
        $region21: #{tpu_custom_call.1} parent=11 // pred_check
          %p167 = pneg %p104
        $region22: #{tpu_custom_call.1} parent=11 // pred_check_branch
          %169 = sbr.rel (%p167) target = $region24
        $region23: #{tpu_custom_call.1} parent=11 // pred_region
          %s171 = ssub.s32 16, 16
          %172 = vsyncadd [#allocation6], %s171
          %s174 = sshll.u32 %s3, 4
          %s175 = int_to_ptr.vmem [resolvable:$true] %s174
          %177 = dma.vmem_to_smem %s175, 16, [#allocation7], [#allocation6]
        $region24: #{tpu_custom_call.1} parent=11 // pred_fallthru
          _
      $region12: #{tpu_custom_call.1} parent=5 // pred_fallthru
        _
      %p178 = scmp.lt.s32.totalorder %s15, 2
      // Predicated region
      $region25: #{tpu_custom_call.1} parent=5 // pred_check
        %p179 = pneg %p178
      $region26: #{tpu_custom_call.1} parent=5 // pred_check_branch
        %181 = sbr.rel (%p179) target = $region28
      $region27: #{tpu_custom_call.1} parent=5 // pred_region
        // Predicated region
        $region29: #{tpu_custom_call.1} parent=27 // pred_check
          %p182 = pneg %p35
        $region30: #{tpu_custom_call.1} parent=27 // pred_check_branch
          %184 = sbr.rel (%p182) target = $region32
        $region31: #{tpu_custom_call.1} parent=27 // pred_region
          %p185 = scmp.lt.s32.totalorder %s15, 1
          %s186 = scalar_select %p185, %s15, 1
          %s187 = smul.addr %s186, 12
          %s188 = smul.addr %s187, 4
          %s189 = scalar_lea.vmem %s0, %s188
        $region32: #{tpu_custom_call.1} parent=27 // pred_fallthru
          _
      $region28: #{tpu_custom_call.1} parent=5 // pred_fallthru
        _
      %p190 = scmp.le.s32.totalorder 1, %s15
      %p191 = scmp.lt.s32.totalorder %s15, 3
      %p192 = pnand %p190, %p191
      %p193 = pneg %p192
      // Predicated region
      $region33: #{tpu_custom_call.1} parent=5 // pred_check
        _
      $region34: #{tpu_custom_call.1} parent=5 // pred_check_branch
        %195 = sbr.rel (%p192) target = $region36
      $region35: #{tpu_custom_call.1} parent=5 // pred_region
        %s196 = ssub.s32 %s15, 1
        // Predicated region
        $region37: #{tpu_custom_call.1} parent=35 // pred_check
          %p197 = pneg %p62
        $region38: #{tpu_custom_call.1} parent=35 // pred_check_branch
          %199 = sbr.rel (%p197) target = $region40
        $region39: #{tpu_custom_call.1} parent=35 // pred_region
          %200 = dma.done [#allocation4], 64
        $region40: #{tpu_custom_call.1} parent=35 // pred_fallthru
          _
        // Predicated region
        $region41: #{tpu_custom_call.1} parent=35 // pred_check
          %p201 = pneg %p83
        $region42: #{tpu_custom_call.1} parent=35 // pred_check_branch
          %203 = sbr.rel (%p201) target = $region44
        $region43: #{tpu_custom_call.1} parent=35 // pred_region
          %204 = dma.done [#allocation6], 64
        $region44: #{tpu_custom_call.1} parent=35 // pred_fallthru
          _
        // Predicated region
        $region45: #{tpu_custom_call.1} parent=35 // pred_check
          %p205 = pneg %p104
        $region46: #{tpu_custom_call.1} parent=35 // pred_check_branch
          %207 = sbr.rel (%p205) target = $region48
        $region47: #{tpu_custom_call.1} parent=35 // pred_region
          %208 = dma.done [#allocation6], 16
        $region48: #{tpu_custom_call.1} parent=35 // pred_fallthru
          _
        %209 = sfence
        %p210 = scmp.lt.s32.totalorder %s20, 1
        %s211 = scalar_select %p210, %s20, 1
        %s212 = smul.addr %s211, 12
        %s213 = smul.addr %s212, 4
        %s214 = scalar_lea.vmem %s0, %s213
        %p215 = pneg %p41
        %p216 = pneg %p38
        %p217 = pneg %p62
        %p218 = pneg %p59
        %p219 = pneg %p83
        %p220 = pneg %p80
        %p221 = pneg %p104
        %p222 = pneg %p101
        %p223 = pneg %p130
        %p224 = pneg %p127
        %s225 = sand.u32 %s117, 1
        %s226 = scalar_lea.sflag [#allocation3], %s225
        %s227 = sand.u32 %s117, 1
        %s228 = smul.addr %s227, 64
        %s229 = scalar_lea.vmem [#allocation8], %s228
        %p230 = scmp.lt.s32.totalorder %s20, 1
        %s231 = scalar_select %p230, %s20, 1
        %s232 = smul.addr %s231, 12
        %s233 = smul.addr %s232, 4
        %s234 = scalar_lea.vmem %s0, %s233
        %v235 = vld [vmem:[%s234] sm:$0xf]
        %v236 = vld [vmem:[%s234 + $0x4] sm:$0xf]
        %v237 = vld [vmem:[%s234 + $0x8] sm:$0x1]
        %v238 = vld [vmem:[%s234 + $0xc] sm:$0xf]
        %v239 = vld [vmem:[%s234 + $0x10] sm:$0xf]
        %v240 = vld [vmem:[%s234 + $0x14] sm:$0x1]
        %v241 = vld [vmem:[%s234 + $0x18] sm:$0xf]
        %v242 = vld [vmem:[%s234 + $0x1c] sm:$0xf]
        %v243 = vld [vmem:[%s234 + $0x20] sm:$0x1]
        %v244 = vld [vmem:[%s234 + $0x24] sm:$0xf]
        %v245 = vld [vmem:[%s234 + $0x28] sm:$0xf]
        %v246 = vld [vmem:[%s234 + $0x2c] sm:$0x1]
        %v247 = vunpack.c.l.bf16 %v235
        %v248 = vunpack.c.l.bf16 %v236
        %v249 = vunpack.c.l.bf16 %v237
        %v250 = vunpack.c.l.bf16 %v238
        %v251 = vunpack.c.l.bf16 %v239
        %v252 = vunpack.c.l.bf16 %v240
        %v253 = vunpack.c.l.bf16 %v241
        %v254 = vunpack.c.l.bf16 %v242
        %v255 = vunpack.c.l.bf16 %v243
        %v256 = vunpack.c.l.bf16 %v244
        %v257 = vunpack.c.l.bf16 %v245
        %v258 = vunpack.c.l.bf16 %v246
        %s259 = sld [smem:[#allocation2]]
        %v260 = vstv %s259
        %v261 = vmul.f32 %v247, %v260
        %v262 = vmul.f32 %v248, %v260
        %s263 = sld [smem:[#allocation2 + $0x1]]
        %v264 = vstv %s263
        %v265 = vmul.f32 %v247, %v264
        %v266 = vmul.f32 %v248, %v264
        %269 = vrot.lane.b32.xlu0 %v265, 127
        %v270 = vpop.permute.xlu0 %269
        %271 = vrot.lane.b32.xlu0 %v266, 127
        %v272 = vpop.permute.xlu0 %271
        %v275 = vadd.f32 %v261, %v270
        %v276 = vadd.f32 %v262, %v272
        %s277 = sld [smem:[#allocation2 + $0x2]]
        %v278 = vstv %s277
        %v279 = vmul.f32 %v247, %v278
        %v280 = vmul.f32 %v248, %v278
        %283 = vrot.lane.b32.xlu0 %v279, 126
        %v284 = vpop.permute.xlu0 %283
        %285 = vrot.lane.b32.xlu0 %v280, 126
        %v286 = vpop.permute.xlu0 %285
        %v289 = vadd.f32 %v275, %v284
        %v290 = vadd.f32 %v276, %v286
        %s291 = sld [smem:[#allocation2 + $0x3]]
        %v292 = vstv %s291
        %v293 = vmul.f32 %v247, %v292
        %v294 = vmul.f32 %v248, %v292
        %v295 = vmul.f32 %v249, %v292
        %vm299 = vcmask 1046528
        %v300 = vrot.slane %v293, 1
        %v301 = vrot.slane %v294, 1
        %v302 = vsel %vm299, %v300, %v301
        %v303 = vrot.slane %v295, 1
        %v304 = vsel %vm299, %v301, %v303
        %v307 = vadd.f32 %v289, %v302
        %v308 = vadd.f32 %v290, %v304
        %s309 = sld [smem:[#allocation2 + $0x4]]
        %v310 = vstv %s309
        %v311 = vmul.f32 %v247, %v310
        %v312 = vmul.f32 %v248, %v310
        %v313 = vmul.f32 %v249, %v310
        %v317 = vrot.slane %v311, 1
        %v318 = vrot.slane %v312, 1
        %v319 = vsel %vm299, %v317, %v318
        %v320 = vrot.slane %v313, 1
        %v321 = vsel %vm299, %v318, %v320
        %322 = vrot.lane.b32.xlu0 %v319, 127
        %v323 = vpop.permute.xlu0 %322
        %324 = vrot.lane.b32.xlu0 %v321, 127
        %v325 = vpop.permute.xlu0 %324
        %v328 = vadd.f32 %v307, %v323
        %v329 = vadd.f32 %v308, %v325
        %s330 = sld [smem:[#allocation2 + $0x5]]
        %v331 = vstv %s330
        %v332 = vmul.f32 %v247, %v331
        %v333 = vmul.f32 %v248, %v331
        %v334 = vmul.f32 %v249, %v331
        %v338 = vrot.slane %v332, 1
        %v339 = vrot.slane %v333, 1
        %v340 = vsel %vm299, %v338, %v339
        %v341 = vrot.slane %v334, 1
        %v342 = vsel %vm299, %v339, %v341
        %343 = vrot.lane.b32.xlu0 %v340, 126
        %v344 = vpop.permute.xlu0 %343
        %345 = vrot.lane.b32.xlu0 %v342, 126
        %v346 = vpop.permute.xlu0 %345
        %v349 = vadd.f32 %v328, %v344
        %v350 = vadd.f32 %v329, %v346
        %s351 = sld [smem:[#allocation2 + $0x6]]
        %v352 = vstv %s351
        %v353 = vmul.f32 %v247, %v352
        %v354 = vmul.f32 %v248, %v352
        %v355 = vmul.f32 %v249, %v352
        %vm359 = vcmask 1045504
        %v360 = vrot.slane %v353, 2
        %v361 = vrot.slane %v354, 2
        %v362 = vsel %vm359, %v360, %v361
        %v363 = vrot.slane %v355, 2
        %v364 = vsel %vm359, %v361, %v363
        %v367 = vadd.f32 %v349, %v362
        %v368 = vadd.f32 %v350, %v364
        %s369 = sld [smem:[#allocation2 + $0x7]]
        %v370 = vstv %s369
        %v371 = vmul.f32 %v247, %v370
        %v372 = vmul.f32 %v248, %v370
        %v373 = vmul.f32 %v249, %v370
        %v377 = vrot.slane %v371, 2
        %v378 = vrot.slane %v372, 2
        %v379 = vsel %vm359, %v377, %v378
        %v380 = vrot.slane %v373, 2
        %v381 = vsel %vm359, %v378, %v380
        %382 = vrot.lane.b32.xlu0 %v379, 127
        %v383 = vpop.permute.xlu0 %382
        %384 = vrot.lane.b32.xlu0 %v381, 127
        %v385 = vpop.permute.xlu0 %384
        %v388 = vadd.f32 %v367, %v383
        %v389 = vadd.f32 %v368, %v385
        %s390 = sld [smem:[#allocation2 + $0x8]]
        %v391 = vstv %s390
        %v392 = vmul.f32 %v247, %v391
        %v393 = vmul.f32 %v248, %v391
        %v394 = vmul.f32 %v249, %v391
        %v398 = vrot.slane %v392, 2
        %v399 = vrot.slane %v393, 2
        %v400 = vsel %vm359, %v398, %v399
        %v401 = vrot.slane %v394, 2
        %v402 = vsel %vm359, %v399, %v401
        %403 = vrot.lane.b32.xlu0 %v400, 126
        %v404 = vpop.permute.xlu0 %403
        %405 = vrot.lane.b32.xlu0 %v402, 126
        %v406 = vpop.permute.xlu0 %405
        %v409 = vadd.f32 %v388, %v404
        %v410 = vadd.f32 %v389, %v406
        %s411 = sld [smem:[#allocation5]]
        %v412 = vstv %s411
        %v413 = vmul.f32 %v409, %v412
        %v414 = vmul.f32 %v410, %v412
        %s415 = sld [smem:[#allocation5 + $0x1]]
        %v416 = vstv %s415
        %v417 = vmul.f32 %v409, %v416
        %v418 = vmul.f32 %v410, %v416
        %s419 = sld [smem:[#allocation5 + $0x2]]
        %v420 = vstv %s419
        %v421 = vmul.f32 %v409, %v420
        %v422 = vmul.f32 %v410, %v420
        %s423 = sld [smem:[#allocation5 + $0x3]]
        %v424 = vstv %s423
        %v425 = vmul.f32 %v409, %v424
        %v426 = vmul.f32 %v410, %v424
        %s427 = sld [smem:[#allocation2 + $0x80]]
        %v428 = vstv %s427
        %v429 = vmul.f32 %v250, %v428
        %v430 = vmul.f32 %v251, %v428
        %s431 = sld [smem:[#allocation2 + $0x81]]
        %v432 = vstv %s431
        %v433 = vmul.f32 %v250, %v432
        %v434 = vmul.f32 %v251, %v432
        %437 = vrot.lane.b32.xlu0 %v433, 127
        %v438 = vpop.permute.xlu0 %437
        %439 = vrot.lane.b32.xlu0 %v434, 127
        %v440 = vpop.permute.xlu0 %439
        %v443 = vadd.f32 %v429, %v438
        %v444 = vadd.f32 %v430, %v440
        %s445 = sld [smem:[#allocation2 + $0x82]]
        %v446 = vstv %s445
        %v447 = vmul.f32 %v250, %v446
        %v448 = vmul.f32 %v251, %v446
        %451 = vrot.lane.b32.xlu0 %v447, 126
        %v452 = vpop.permute.xlu0 %451
        %453 = vrot.lane.b32.xlu0 %v448, 126
        %v454 = vpop.permute.xlu0 %453
        %v457 = vadd.f32 %v443, %v452
        %v458 = vadd.f32 %v444, %v454
        %s459 = sld [smem:[#allocation2 + $0x83]]
        %v460 = vstv %s459
        %v461 = vmul.f32 %v250, %v460
        %v462 = vmul.f32 %v251, %v460
        %v463 = vmul.f32 %v252, %v460
        %v467 = vrot.slane %v461, 1
        %v468 = vrot.slane %v462, 1
        %v469 = vsel %vm299, %v467, %v468
        %v470 = vrot.slane %v463, 1
        %v471 = vsel %vm299, %v468, %v470
        %v474 = vadd.f32 %v457, %v469
        %v475 = vadd.f32 %v458, %v471
        %s476 = sld [smem:[#allocation2 + $0x84]]
        %v477 = vstv %s476
        %v478 = vmul.f32 %v250, %v477
        %v479 = vmul.f32 %v251, %v477
        %v480 = vmul.f32 %v252, %v477
        %v484 = vrot.slane %v478, 1
        %v485 = vrot.slane %v479, 1
        %v486 = vsel %vm299, %v484, %v485
        %v487 = vrot.slane %v480, 1
        %v488 = vsel %vm299, %v485, %v487
        %489 = vrot.lane.b32.xlu0 %v486, 127
        %v490 = vpop.permute.xlu0 %489
        %491 = vrot.lane.b32.xlu0 %v488, 127
        %v492 = vpop.permute.xlu0 %491
        %v495 = vadd.f32 %v474, %v490
        %v496 = vadd.f32 %v475, %v492
        %s497 = sld [smem:[#allocation2 + $0x85]]
        %v498 = vstv %s497
        %v499 = vmul.f32 %v250, %v498
        %v500 = vmul.f32 %v251, %v498
        %v501 = vmul.f32 %v252, %v498
        %v505 = vrot.slane %v499, 1
        %v506 = vrot.slane %v500, 1
        %v507 = vsel %vm299, %v505, %v506
        %v508 = vrot.slane %v501, 1
        %v509 = vsel %vm299, %v506, %v508
        %510 = vrot.lane.b32.xlu0 %v507, 126
        %v511 = vpop.permute.xlu0 %510
        %512 = vrot.lane.b32.xlu0 %v509, 126
        %v513 = vpop.permute.xlu0 %512
        %v516 = vadd.f32 %v495, %v511
        %v517 = vadd.f32 %v496, %v513
        %s518 = sld [smem:[#allocation2 + $0x86]]
        %v519 = vstv %s518
        %v520 = vmul.f32 %v250, %v519
        %v521 = vmul.f32 %v251, %v519
        %v522 = vmul.f32 %v252, %v519
        %v526 = vrot.slane %v520, 2
        %v527 = vrot.slane %v521, 2
        %v528 = vsel %vm359, %v526, %v527
        %v529 = vrot.slane %v522, 2
        %v530 = vsel %vm359, %v527, %v529
        %v533 = vadd.f32 %v516, %v528
        %v534 = vadd.f32 %v517, %v530
        %s535 = sld [smem:[#allocation2 + $0x87]]
        %v536 = vstv %s535
        %v537 = vmul.f32 %v250, %v536
        %v538 = vmul.f32 %v251, %v536
        %v539 = vmul.f32 %v252, %v536
        %v543 = vrot.slane %v537, 2
        %v544 = vrot.slane %v538, 2
        %v545 = vsel %vm359, %v543, %v544
        %v546 = vrot.slane %v539, 2
        %v547 = vsel %vm359, %v544, %v546
        %548 = vrot.lane.b32.xlu0 %v545, 127
        %v549 = vpop.permute.xlu0 %548
        %550 = vrot.lane.b32.xlu0 %v547, 127
        %v551 = vpop.permute.xlu0 %550
        %v554 = vadd.f32 %v533, %v549
        %v555 = vadd.f32 %v534, %v551
        %s556 = sld [smem:[#allocation2 + $0x88]]
        %v557 = vstv %s556
        %v558 = vmul.f32 %v250, %v557
        %v559 = vmul.f32 %v251, %v557
        %v560 = vmul.f32 %v252, %v557
        %v564 = vrot.slane %v558, 2
        %v565 = vrot.slane %v559, 2
        %v566 = vsel %vm359, %v564, %v565
        %v567 = vrot.slane %v560, 2
        %v568 = vsel %vm359, %v565, %v567
        %569 = vrot.lane.b32.xlu0 %v566, 126
        %v570 = vpop.permute.xlu0 %569
        %571 = vrot.lane.b32.xlu0 %v568, 126
        %v572 = vpop.permute.xlu0 %571
        %v575 = vadd.f32 %v554, %v570
        %v576 = vadd.f32 %v555, %v572
        %s577 = sld [smem:[#allocation5 + $0x80]]
        %v578 = vstv %s577
        %v579 = vmul.f32 %v575, %v578
        %v580 = vmul.f32 %v576, %v578
        %v581 = vadd.f32 %v413, %v579
        %v582 = vadd.f32 %v414, %v580
        %s583 = sld [smem:[#allocation5 + $0x81]]
        %v584 = vstv %s583
        %v585 = vmul.f32 %v575, %v584
        %v586 = vmul.f32 %v576, %v584
        %v587 = vadd.f32 %v417, %v585
        %v588 = vadd.f32 %v418, %v586
        %s589 = sld [smem:[#allocation5 + $0x82]]
        %v590 = vstv %s589
        %v591 = vmul.f32 %v575, %v590
        %v592 = vmul.f32 %v576, %v590
        %v593 = vadd.f32 %v421, %v591
        %v594 = vadd.f32 %v422, %v592
        %s595 = sld [smem:[#allocation5 + $0x83]]
        %v596 = vstv %s595
        %v597 = vmul.f32 %v575, %v596
        %v598 = vmul.f32 %v576, %v596
        %v599 = vadd.f32 %v425, %v597
        %v600 = vadd.f32 %v426, %v598
        %s601 = sld [smem:[#allocation2 + $0x100]]
        %v602 = vstv %s601
        %v603 = vmul.f32 %v253, %v602
        %v604 = vmul.f32 %v254, %v602
        %s605 = sld [smem:[#allocation2 + $0x101]]
        %v606 = vstv %s605
        %v607 = vmul.f32 %v253, %v606
        %v608 = vmul.f32 %v254, %v606
        %611 = vrot.lane.b32.xlu0 %v607, 127
        %v612 = vpop.permute.xlu0 %611
        %613 = vrot.lane.b32.xlu0 %v608, 127
        %v614 = vpop.permute.xlu0 %613
        %v617 = vadd.f32 %v603, %v612
        %v618 = vadd.f32 %v604, %v614
        %s619 = sld [smem:[#allocation2 + $0x102]]
        %v620 = vstv %s619
        %v621 = vmul.f32 %v253, %v620
        %v622 = vmul.f32 %v254, %v620
        %625 = vrot.lane.b32.xlu0 %v621, 126
        %v626 = vpop.permute.xlu0 %625
        %627 = vrot.lane.b32.xlu0 %v622, 126
        %v628 = vpop.permute.xlu0 %627
        %v631 = vadd.f32 %v617, %v626
        %v632 = vadd.f32 %v618, %v628
        %s633 = sld [smem:[#allocation2 + $0x103]]
        %v634 = vstv %s633
        %v635 = vmul.f32 %v253, %v634
        %v636 = vmul.f32 %v254, %v634
        %v637 = vmul.f32 %v255, %v634
        %v641 = vrot.slane %v635, 1
        %v642 = vrot.slane %v636, 1
        %v643 = vsel %vm299, %v641, %v642
        %v644 = vrot.slane %v637, 1
        %v645 = vsel %vm299, %v642, %v644
        %v648 = vadd.f32 %v631, %v643
        %v649 = vadd.f32 %v632, %v645
        %s650 = sld [smem:[#allocation2 + $0x104]]
        %v651 = vstv %s650
        %v652 = vmul.f32 %v253, %v651
        %v653 = vmul.f32 %v254, %v651
        %v654 = vmul.f32 %v255, %v651
        %v658 = vrot.slane %v652, 1
        %v659 = vrot.slane %v653, 1
        %v660 = vsel %vm299, %v658, %v659
        %v661 = vrot.slane %v654, 1
        %v662 = vsel %vm299, %v659, %v661
        %663 = vrot.lane.b32.xlu0 %v660, 127
        %v664 = vpop.permute.xlu0 %663
        %665 = vrot.lane.b32.xlu0 %v662, 127
        %v666 = vpop.permute.xlu0 %665
        %v669 = vadd.f32 %v648, %v664
        %v670 = vadd.f32 %v649, %v666
        %s671 = sld [smem:[#allocation2 + $0x105]]
        %v672 = vstv %s671
        %v673 = vmul.f32 %v253, %v672
        %v674 = vmul.f32 %v254, %v672
        %v675 = vmul.f32 %v255, %v672
        %v679 = vrot.slane %v673, 1
        %v680 = vrot.slane %v674, 1
        %v681 = vsel %vm299, %v679, %v680
        %v682 = vrot.slane %v675, 1
        %v683 = vsel %vm299, %v680, %v682
        %684 = vrot.lane.b32.xlu0 %v681, 126
        %v685 = vpop.permute.xlu0 %684
        %686 = vrot.lane.b32.xlu0 %v683, 126
        %v687 = vpop.permute.xlu0 %686
        %v690 = vadd.f32 %v669, %v685
        %v691 = vadd.f32 %v670, %v687
        %s692 = sld [smem:[#allocation2 + $0x106]]
        %v693 = vstv %s692
        %v694 = vmul.f32 %v253, %v693
        %v695 = vmul.f32 %v254, %v693
        %v696 = vmul.f32 %v255, %v693
        %v700 = vrot.slane %v694, 2
        %v701 = vrot.slane %v695, 2
        %v702 = vsel %vm359, %v700, %v701
        %v703 = vrot.slane %v696, 2
        %v704 = vsel %vm359, %v701, %v703
        %v707 = vadd.f32 %v690, %v702
        %v708 = vadd.f32 %v691, %v704
        %s709 = sld [smem:[#allocation2 + $0x107]]
        %v710 = vstv %s709
        %v711 = vmul.f32 %v253, %v710
        %v712 = vmul.f32 %v254, %v710
        %v713 = vmul.f32 %v255, %v710
        %v717 = vrot.slane %v711, 2
        %v718 = vrot.slane %v712, 2
        %v719 = vsel %vm359, %v717, %v718
        %v720 = vrot.slane %v713, 2
        %v721 = vsel %vm359, %v718, %v720
        %722 = vrot.lane.b32.xlu0 %v719, 127
        %v723 = vpop.permute.xlu0 %722
        %724 = vrot.lane.b32.xlu0 %v721, 127
        %v725 = vpop.permute.xlu0 %724
        %v728 = vadd.f32 %v707, %v723
        %v729 = vadd.f32 %v708, %v725
        %s730 = sld [smem:[#allocation2 + $0x108]]
        %v731 = vstv %s730
        %v732 = vmul.f32 %v253, %v731
        %v733 = vmul.f32 %v254, %v731
        %v734 = vmul.f32 %v255, %v731
        %v738 = vrot.slane %v732, 2
        %v739 = vrot.slane %v733, 2
        %v740 = vsel %vm359, %v738, %v739
        %v741 = vrot.slane %v734, 2
        %v742 = vsel %vm359, %v739, %v741
        %743 = vrot.lane.b32.xlu0 %v740, 126
        %v744 = vpop.permute.xlu0 %743
        %745 = vrot.lane.b32.xlu0 %v742, 126
        %v746 = vpop.permute.xlu0 %745
        %v749 = vadd.f32 %v728, %v744
        %v750 = vadd.f32 %v729, %v746
        %s751 = sld [smem:[#allocation5 + $0x100]]
        %v752 = vstv %s751
        %v753 = vmul.f32 %v749, %v752
        %v754 = vmul.f32 %v750, %v752
        %v755 = vadd.f32 %v581, %v753
        %v756 = vadd.f32 %v582, %v754
        %s757 = sld [smem:[#allocation5 + $0x101]]
        %v758 = vstv %s757
        %v759 = vmul.f32 %v749, %v758
        %v760 = vmul.f32 %v750, %v758
        %v761 = vadd.f32 %v587, %v759
        %v762 = vadd.f32 %v588, %v760
        %s763 = sld [smem:[#allocation5 + $0x102]]
        %v764 = vstv %s763
        %v765 = vmul.f32 %v749, %v764
        %v766 = vmul.f32 %v750, %v764
        %v767 = vadd.f32 %v593, %v765
        %v768 = vadd.f32 %v594, %v766
        %s769 = sld [smem:[#allocation5 + $0x103]]
        %v770 = vstv %s769
        %v771 = vmul.f32 %v749, %v770
        %v772 = vmul.f32 %v750, %v770
        %v773 = vadd.f32 %v599, %v771
        %v774 = vadd.f32 %v600, %v772
        %s775 = sld [smem:[#allocation2 + $0x180]]
        %v776 = vstv %s775
        %v777 = vmul.f32 %v256, %v776
        %v778 = vmul.f32 %v257, %v776
        %s779 = sld [smem:[#allocation2 + $0x181]]
        %v780 = vstv %s779
        %v781 = vmul.f32 %v256, %v780
        %v782 = vmul.f32 %v257, %v780
        %785 = vrot.lane.b32.xlu0 %v781, 127
        %v786 = vpop.permute.xlu0 %785
        %787 = vrot.lane.b32.xlu0 %v782, 127
        %v788 = vpop.permute.xlu0 %787
        %v791 = vadd.f32 %v777, %v786
        %v792 = vadd.f32 %v778, %v788
        %s793 = sld [smem:[#allocation2 + $0x182]]
        %v794 = vstv %s793
        %v795 = vmul.f32 %v256, %v794
        %v796 = vmul.f32 %v257, %v794
        %799 = vrot.lane.b32.xlu0 %v795, 126
        %v800 = vpop.permute.xlu0 %799
        %801 = vrot.lane.b32.xlu0 %v796, 126
        %v802 = vpop.permute.xlu0 %801
        %v805 = vadd.f32 %v791, %v800
        %v806 = vadd.f32 %v792, %v802
        %s807 = sld [smem:[#allocation2 + $0x183]]
        %v808 = vstv %s807
        %v809 = vmul.f32 %v256, %v808
        %v810 = vmul.f32 %v257, %v808
        %v811 = vmul.f32 %v258, %v808
        %v815 = vrot.slane %v809, 1
        %v816 = vrot.slane %v810, 1
        %v817 = vsel %vm299, %v815, %v816
        %v818 = vrot.slane %v811, 1
        %v819 = vsel %vm299, %v816, %v818
        %v822 = vadd.f32 %v805, %v817
        %v823 = vadd.f32 %v806, %v819
        %s824 = sld [smem:[#allocation2 + $0x184]]
        %v825 = vstv %s824
        %v826 = vmul.f32 %v256, %v825
        %v827 = vmul.f32 %v257, %v825
        %v828 = vmul.f32 %v258, %v825
        %v832 = vrot.slane %v826, 1
        %v833 = vrot.slane %v827, 1
        %v834 = vsel %vm299, %v832, %v833
        %v835 = vrot.slane %v828, 1
        %v836 = vsel %vm299, %v833, %v835
        %837 = vrot.lane.b32.xlu0 %v834, 127
        %v838 = vpop.permute.xlu0 %837
        %839 = vrot.lane.b32.xlu0 %v836, 127
        %v840 = vpop.permute.xlu0 %839
        %v843 = vadd.f32 %v822, %v838
        %v844 = vadd.f32 %v823, %v840
        %s845 = sld [smem:[#allocation2 + $0x185]]
        %v846 = vstv %s845
        %v847 = vmul.f32 %v256, %v846
        %v848 = vmul.f32 %v257, %v846
        %v849 = vmul.f32 %v258, %v846
        %v853 = vrot.slane %v847, 1
        %v854 = vrot.slane %v848, 1
        %v855 = vsel %vm299, %v853, %v854
        %v856 = vrot.slane %v849, 1
        %v857 = vsel %vm299, %v854, %v856
        %858 = vrot.lane.b32.xlu0 %v855, 126
        %v859 = vpop.permute.xlu0 %858
        %860 = vrot.lane.b32.xlu0 %v857, 126
        %v861 = vpop.permute.xlu0 %860
        %v864 = vadd.f32 %v843, %v859
        %v865 = vadd.f32 %v844, %v861
        %s866 = sld [smem:[#allocation2 + $0x186]]
        %v867 = vstv %s866
        %v868 = vmul.f32 %v256, %v867
        %v869 = vmul.f32 %v257, %v867
        %v870 = vmul.f32 %v258, %v867
        %v874 = vrot.slane %v868, 2
        %v875 = vrot.slane %v869, 2
        %v876 = vsel %vm359, %v874, %v875
        %v877 = vrot.slane %v870, 2
        %v878 = vsel %vm359, %v875, %v877
        %v881 = vadd.f32 %v864, %v876
        %v882 = vadd.f32 %v865, %v878
        %s883 = sld [smem:[#allocation2 + $0x187]]
        %v884 = vstv %s883
        %v885 = vmul.f32 %v256, %v884
        %v886 = vmul.f32 %v257, %v884
        %v887 = vmul.f32 %v258, %v884
        %v891 = vrot.slane %v885, 2
        %v892 = vrot.slane %v886, 2
        %v893 = vsel %vm359, %v891, %v892
        %v894 = vrot.slane %v887, 2
        %v895 = vsel %vm359, %v892, %v894
        %896 = vrot.lane.b32.xlu0 %v893, 127
        %v897 = vpop.permute.xlu0 %896
        %898 = vrot.lane.b32.xlu0 %v895, 127
        %v899 = vpop.permute.xlu0 %898
        %v902 = vadd.f32 %v881, %v897
        %v903 = vadd.f32 %v882, %v899
        %s904 = sld [smem:[#allocation2 + $0x188]]
        %v905 = vstv %s904
        %v906 = vmul.f32 %v256, %v905
        %v907 = vmul.f32 %v257, %v905
        %v908 = vmul.f32 %v258, %v905
        %v912 = vrot.slane %v906, 2
        %v913 = vrot.slane %v907, 2
        %v914 = vsel %vm359, %v912, %v913
        %v915 = vrot.slane %v908, 2
        %v916 = vsel %vm359, %v913, %v915
        %917 = vrot.lane.b32.xlu0 %v914, 126
        %v918 = vpop.permute.xlu0 %917
        %919 = vrot.lane.b32.xlu0 %v916, 126
        %v920 = vpop.permute.xlu0 %919
        %v923 = vadd.f32 %v902, %v918
        %v924 = vadd.f32 %v903, %v920
        %s925 = sld [smem:[#allocation5 + $0x180]]
        %v926 = vstv %s925
        %v927 = vmul.f32 %v923, %v926
        %v928 = vmul.f32 %v924, %v926
        %v929 = vadd.f32 %v755, %v927
        %v930 = vadd.f32 %v756, %v928
        %s931 = sld [smem:[#allocation5 + $0x181]]
        %v932 = vstv %s931
        %v933 = vmul.f32 %v923, %v932
        %v934 = vmul.f32 %v924, %v932
        %v935 = vadd.f32 %v761, %v933
        %v936 = vadd.f32 %v762, %v934
        %s937 = sld [smem:[#allocation5 + $0x182]]
        %v938 = vstv %s937
        %v939 = vmul.f32 %v923, %v938
        %v940 = vmul.f32 %v924, %v938
        %v941 = vadd.f32 %v767, %v939
        %v942 = vadd.f32 %v768, %v940
        %s943 = sld [smem:[#allocation5 + $0x183]]
        %v944 = vstv %s943
        %v945 = vmul.f32 %v923, %v944
        %v946 = vmul.f32 %v924, %v944
        %v947 = vadd.f32 %v773, %v945
        %v948 = vadd.f32 %v774, %v946
        %s949 = sld [smem:[#allocation7]]
        %v950 = vstv %s949
        %v951 = vadd.f32 %v929, %v950
        %v952 = vadd.f32 %v930, %v950
        %vm953 = vcmask 130048
        %954 = vst.msk [vmem:[%s229] sm:$0xff] %vm953, %v951
        %955 = vst.msk [vmem:[%s229 + $0x8] sm:$0xff] %vm953, %v952
        %s956 = sld [smem:[#allocation7 + $0x1]]
        %v957 = vstv %s956
        %v958 = vadd.f32 %v935, %v957
        %v959 = vadd.f32 %v936, %v957
        %s960 = scalar_lea.vmem %s229, 16 [#allocation8]
        %961 = vst.msk [vmem:[%s960] sm:$0xff] %vm953, %v958
        %962 = vst.msk [vmem:[%s960 + $0x8] sm:$0xff] %vm953, %v959
        %s963 = sld [smem:[#allocation7 + $0x2]]
        %v964 = vstv %s963
        %v965 = vadd.f32 %v941, %v964
        %v966 = vadd.f32 %v942, %v964
        %s967 = scalar_lea.vmem %s229, 32 [#allocation8]
        %968 = vst.msk [vmem:[%s967] sm:$0xff] %vm953, %v965
        %969 = vst.msk [vmem:[%s967 + $0x8] sm:$0xff] %vm953, %v966
        %s970 = sld [smem:[#allocation7 + $0x3]]
        %v971 = vstv %s970
        %v972 = vadd.f32 %v947, %v971
        %v973 = vadd.f32 %v948, %v971
        %s974 = scalar_lea.vmem %s229, 48 [#allocation8]
        %975 = vst.msk [vmem:[%s974] sm:$0xff] %vm953, %v972
        %976 = vst.msk [vmem:[%s974 + $0x8] sm:$0xff] %vm953, %v973
        %s977 = sand.u32 %s117, 1
        %s978 = scalar_lea.sflag [#allocation3], %s977
        %s979 = sand.u32 %s117, 1
        %s980 = smul.addr %s979, 64
        %s981 = scalar_lea.vmem [#allocation8], %s980
        // Predicated region
        $region49: #{tpu_custom_call.1} parent=35 // pred_check
          %p982 = pneg %p127
        $region50: #{tpu_custom_call.1} parent=35 // pred_check_branch
          %984 = sbr.rel (%p982) target = $region52
        $region51: #{tpu_custom_call.1} parent=35 // pred_region
          %s986 = ssub.s32 1024, 1024
          %987 = vsyncadd %s978, %s986
          %s988 = smul.addr %s20, 8
          %s989 = smul.addr %s988, 128
          %s990 = scalar_lea.hbm %s4, %s989
          %s991 = sshll.u32 %s981, 4
          %s992 = int_to_ptr.vmem [resolvable:$true] %s991
          %997 = dma.vmem_to_hbm [thread:$0]  %s992, 1024, %s990, %s978, 128, 128, 8
        $region52: #{tpu_custom_call.1} parent=35 // pred_fallthru
          _
      $region36: #{tpu_custom_call.1} parent=5 // pred_fallthru
        _
      %p998 = scmp.le.s32.totalorder 2, %s15
      // Predicated region
      $region53: #{tpu_custom_call.1} parent=5 // pred_check
        %p999 = pneg %p998
      $region54: #{tpu_custom_call.1} parent=5 // pred_check_branch
        %1001 = sbr.rel (%p999) target = $region56
      $region55: #{tpu_custom_call.1} parent=5 // pred_region
        %s1002 = ssub.s32 %s15, 2
        // Predicated region
        $region57: #{tpu_custom_call.1} parent=55 // pred_check
          %p1003 = pneg %p133
        $region58: #{tpu_custom_call.1} parent=55 // pred_check_branch
          %1005 = sbr.rel (%p1003) target = $region60
        $region59: #{tpu_custom_call.1} parent=55 // pred_region
          %s1006 = sand.u32 %s118, 1
          %s1007 = scalar_lea.sflag [#allocation3], %s1006
          %s1008 = sand.u32 %s118, 1
          %s1009 = smul.addr %s1008, 64
          %s1010 = scalar_lea.vmem [#allocation8], %s1009
          %1011 = dma.done %s1007, 1024
        $region60: #{tpu_custom_call.1} parent=55 // pred_fallthru
          _
      $region56: #{tpu_custom_call.1} parent=5 // pred_fallthru
        _
    $region6: #{tpu_custom_call.1} parent=1 // loop_footer
      %s19 = sadd.s32 1, %s15
    $region7: #{tpu_custom_call.1} parent=1 // loop_footer_branch
      %14 = sbr.rel target = $region3
    $region8: #{tpu_custom_call.1} parent=1 // loop_exit
      _
    %1012 = vsyncpa [#allocation3], 1
    %s1013 = scalar_lea.sflag [#allocation3], 1
    %1014 = vsyncpa %s1013, 1
    %1015 = vsyncpa [#allocation4], 1
    %s1016 = scalar_lea.sflag [#allocation4], 1
    %1017 = vsyncpa %s1016, 1
    %1018 = vsyncpa [#allocation6], 1

</llo_original>
